<compile_context>
chip_gen: v6e
topology: v6e:2x2x1
jax: 0.10.0
libtpu: 0.0.40
codegen_flags: <defaults>
</compile_context>

<pallas_src>
import jax
import jax.numpy as jnp
from jax import lax
from jax.experimental import pallas as pl
from jax.experimental.pallas import tpu as pltpu


def _resblock_kernel(p_ref, xres_ref, w1_ref, b1_ref, w2_ref, b2_ref, out_ref):
    # p_ref   : (1, 9*Cin, HW)  im2col patches of raw (pre-ReLU) x, tap-major
    # xres_ref: (1, Cin,   HW)  raw x for the residual, output layout
    # w1_ref  : (Cmid, 9*Cin)   packed 3x3 conv weights (tap-major, cin inner)
    # b1_ref  : (Cmid, 1)
    # w2_ref  : (Cin, Cmid)     1x1 conv weights
    # b2_ref  : (Cin, 1)
    # out_ref : (1, Cin, HW)
    h = jnp.maximum(p_ref[0], 0.0)                       # ReLU(x); pad zeros stay zero
    y = jnp.dot(w1_ref[...], h,                          # (Cmid, HW) single MXU matmul
                preferred_element_type=jnp.float32)
    y = jnp.maximum(y + b1_ref[...], 0.0)                # bias + ReLU, lane-dense
    out = jnp.dot(w2_ref[...], y,                        # (Cin, HW) 1x1 conv
                  preferred_element_type=jnp.float32)
    out = out + b2_ref[...] + xres_ref[0]                # bias + residual
    out_ref[0] = out.astype(out_ref.dtype)


def resblock_pallas(x_nchw, w1, b1, w2, b2):
    """x_nchw: (N, Cin, H, W) f32. w1: (Cmid, Cin, 3, 3), b1: (Cmid,),
    w2: (Cin, Cmid, 1, 1), b2: (Cin,). Returns (N, Cin, H, W)."""
    N, cin, H, W = x_nchw.shape
    cmid = w1.shape[0]
    HW = H * W
    K = 9 * cin

    # --- wrapper-side layout plumbing (XLA) ---------------------------------
    # Zero-pad spatial by 1 and im2col into (N, 9*Cin, H*W), tap-major
    # (tap = dy*3+dx outer, cin inner). ReLU is applied later, in the kernel.
    xp = jnp.pad(x_nchw, ((0, 0), (0, 0), (1, 1), (1, 1)))
    taps = [xp[:, :, dy:dy + H, dx:dx + W]               # each (N, Cin, H, W)
            for dy in range(3) for dx in range(3)]
    patches = jnp.stack(taps, axis=1).reshape(N, K, HW)  # (N, 9*Cin, HW)

    # Residual input in the kernel's output layout (free reshape, no transpose).
    x_res = x_nchw.reshape(N, cin, HW)

    # Pack weights: w1 (Cmid, Cin, 3, 3) -> (Cmid, 9*Cin) matching the patch
    # ordering ((dy*3+dx)*Cin + cin); w2 (Cin, Cmid, 1, 1) -> (Cin, Cmid).
    w1_k = jnp.transpose(w1, (0, 2, 3, 1)).reshape(cmid, K)
    w2_k = w2[:, :, 0, 0]
    b1_k = b1.reshape(cmid, 1)
    b2_k = b2.reshape(cin, 1)

    out_flat = pl.pallas_call(
        _resblock_kernel,
        out_shape=jax.ShapeDtypeStruct((N, cin, HW), x_nchw.dtype),
        grid_spec=pltpu.PrefetchScalarGridSpec(
            num_scalar_prefetch=0,
            grid=(N,),
            in_specs=[
                pl.BlockSpec((1, K, HW), lambda n: (n, 0, 0)),
                pl.BlockSpec((1, cin, HW), lambda n: (n, 0, 0)),
                pl.BlockSpec((cmid, K), lambda n: (0, 0)),
                pl.BlockSpec((cmid, 1), lambda n: (0, 0)),
                pl.BlockSpec((cin, cmid), lambda n: (0, 0)),
                pl.BlockSpec((cin, 1), lambda n: (0, 0)),
            ],
            out_specs=pl.BlockSpec((1, cin, HW), lambda n: (n, 0, 0)),
        ),
        compiler_params=pltpu.CompilerParams(
            dimension_semantics=("parallel",)),
    )(patches, x_res, w1_k, b1_k, w2_k, b2_k)

    return out_flat.reshape(N, cin, H, W)


def resblock_ref(x, w1, b1, w2, b2):
    """Pure-JAX reference matching PyTorch ResBlock.forward (NCHW)."""
    h = jnp.maximum(x, 0.0)
    h = lax.conv_general_dilated(h, w1, (1, 1), ((1, 1), (1, 1)),
                                 dimension_numbers=("NCHW", "OIHW", "NCHW"))
    h = h + b1.reshape(1, -1, 1, 1)
    h = jnp.maximum(h, 0.0)
    h = lax.conv_general_dilated(h, w2, (1, 1), ((0, 0), (0, 0)),
                                 dimension_numbers=("NCHW", "OIHW", "NCHW"))
    h = h + b2.reshape(1, -1, 1, 1)
    return h + x


if __name__ == "__main__":
    # Small shapes consistent with the module: batch=2, in_channel=4,
    # channel=8, spatial=16 (H*W = 256 -> lane-dense).
    N, C_IN, C_MID, H, W = 2, 4, 8, 16, 16

    key = jax.random.PRNGKey(0)
    k_x, k_w1, k_b1, k_w2, k_b2 = jax.random.split(key, 5)

    x = jax.random.normal(k_x, (N, C_IN, H, W), dtype=jnp.float32)
    # Deterministic synthetic parameters (shapes from nn.Conv2d in __init__).
    w1 = 0.1 * jax.random.normal(k_w1, (C_MID, C_IN, 3, 3), dtype=jnp.float32)
    b1 = 0.1 * jax.random.normal(k_b1, (C_MID,), dtype=jnp.float32)
    w2 = 0.1 * jax.random.normal(k_w2, (C_IN, C_MID, 1, 1), dtype=jnp.float32)
    b2 = 0.1 * jax.random.normal(k_b2, (C_IN,), dtype=jnp.float32)

    out = resblock_pallas(x, w1, b1, w2, b2)
    out = jax.block_until_ready(out)

    ref = jax.block_until_ready(resblock_ref(x, w1, b1, w2, b2))
    assert out.shape == ref.shape == (N, C_IN, H, W)
    assert jnp.allclose(out, ref, atol=1e-4, rtol=1e-4), "mismatch vs reference"

    print("KERNEL_OK")
</pallas_src>

<mosaic_0001>
module attributes {stable_mosaic.version = 11 : i64} {
  func.func @_resblock_kernel(%arg0: i32, %arg1: memref<1x36x256xf32, #tpu.memory_space<vmem>>, %arg2: memref<1x4x256xf32, #tpu.memory_space<vmem>>, %arg3: memref<8x36xf32, #tpu.memory_space<vmem>>, %arg4: memref<8x1xf32, #tpu.memory_space<vmem>>, %arg5: memref<4x8xf32, #tpu.memory_space<vmem>>, %arg6: memref<4x1xf32, #tpu.memory_space<vmem>>, %arg7: memref<1x4x256xf32, #tpu.memory_space<vmem>>) attributes {dimension_semantics = [#tpu.dimension_semantics<parallel>], iteration_bounds = array<i64: 2>, scalar_prefetch = 0 : i64, scratch_operands = 0 : i64, tpu.core_type = #tpu.core_type<tc>, window_params = [{transform_indices = @transform_0, window_bounds = array<i64: 1, 36, 256>}, {transform_indices = @transform_1, window_bounds = array<i64: 1, 4, 256>}, {pipeline_mode = #tpu.pipeline_mode<synchronous>, transform_indices = @transform_2, window_bounds = array<i64: 8, 36>}, {pipeline_mode = #tpu.pipeline_mode<synchronous>, transform_indices = @transform_3, window_bounds = array<i64: 8, 1>}, {pipeline_mode = #tpu.pipeline_mode<synchronous>, transform_indices = @transform_4, window_bounds = array<i64: 4, 8>}, {pipeline_mode = #tpu.pipeline_mode<synchronous>, transform_indices = @transform_5, window_bounds = array<i64: 4, 1>}, {transform_indices = @transform_6, window_bounds = array<i64: 1, 4, 256>}]} {
    %c0 = arith.constant 0 : index
    %c0_0 = arith.constant 0 : index
    %c0_1 = arith.constant 0 : index
    %0 = vector.load %arg1[%c0, %c0_0, %c0_1] : memref<1x36x256xf32, #tpu.memory_space<vmem>>, vector<1x36x256xf32>
    %1 = vector.shape_cast %0 : vector<1x36x256xf32> to vector<36x256xf32>
    %cst = arith.constant 0.000000e+00 : f32
    %2 = vector.broadcast %cst : f32 to vector<36x256xf32>
    %3 = arith.maximumf %1, %2 : vector<36x256xf32>
    %c0_2 = arith.constant 0 : index
    %c0_3 = arith.constant 0 : index
    %4 = vector.load %arg3[%c0_2, %c0_3] : memref<8x36xf32, #tpu.memory_space<vmem>>, vector<8x36xf32>
    %cst_4 = arith.constant dense<0.000000e+00> : vector<8x256xf32>
    %5 = tpu.matmul %4, %3, %cst_4 {dimension_numbers = #tpu.dot_dimension_numbers<[1], [0], [0], [1], [0, 0, 1, 1], [], []>} : vector<8x36xf32>, vector<36x256xf32>, vector<8x256xf32> -> vector<8x256xf32>
    %c0_5 = arith.constant 0 : index
    %c0_6 = arith.constant 0 : index
    %6 = vector.load %arg4[%c0_5, %c0_6] : memref<8x1xf32, #tpu.memory_space<vmem>>, vector<8x1xf32>
    %7 = vector.broadcast %6 : vector<8x1xf32> to vector<8x256xf32>
    %8 = arith.addf %5, %7 : vector<8x256xf32>
    %cst_7 = arith.constant 0.000000e+00 : f32
    %9 = vector.broadcast %cst_7 : f32 to vector<8x256xf32>
    %10 = arith.maximumf %8, %9 : vector<8x256xf32>
    %c0_8 = arith.constant 0 : index
    %c0_9 = arith.constant 0 : index
    %11 = vector.load %arg5[%c0_8, %c0_9] : memref<4x8xf32, #tpu.memory_space<vmem>>, vector<4x8xf32>
    %cst_10 = arith.constant dense<0.000000e+00> : vector<4x256xf32>
    %12 = tpu.matmul %11, %10, %cst_10 {dimension_numbers = #tpu.dot_dimension_numbers<[1], [0], [0], [1], [0, 0, 1, 1], [], []>} : vector<4x8xf32>, vector<8x256xf32>, vector<4x256xf32> -> vector<4x256xf32>
    %c0_11 = arith.constant 0 : index
    %c0_12 = arith.constant 0 : index
    %13 = vector.load %arg6[%c0_11, %c0_12] : memref<4x1xf32, #tpu.memory_space<vmem>>, vector<4x1xf32>
    %14 = vector.broadcast %13 : vector<4x1xf32> to vector<4x256xf32>
    %15 = arith.addf %12, %14 : vector<4x256xf32>
    %c0_13 = arith.constant 0 : index
    %c0_14 = arith.constant 0 : index
    %c0_15 = arith.constant 0 : index
    %16 = vector.load %arg2[%c0_13, %c0_14, %c0_15] : memref<1x4x256xf32, #tpu.memory_space<vmem>>, vector<1x4x256xf32>
    %17 = vector.shape_cast %16 : vector<1x4x256xf32> to vector<4x256xf32>
    %18 = arith.addf %15, %17 : vector<4x256xf32>
    %c0_16 = arith.constant 0 : index
    %c0_17 = arith.constant 0 : index
    %c0_18 = arith.constant 0 : index
    %19 = vector.load %arg7[%c0_16, %c0_17, %c0_18] : memref<1x4x256xf32, #tpu.memory_space<vmem>>, vector<1x4x256xf32>
    %20 = vector.shape_cast %19 : vector<1x4x256xf32> to vector<4x256xf32>
    %21 = vector.shape_cast %18 : vector<4x256xf32> to vector<1x4x256xf32>
    tpu.vector_store %arg7[%c0_16, %c0_17, %c0_18], %21 {strides = array<i32>} : memref<1x4x256xf32, #tpu.memory_space<vmem>>, vector<1x4x256xf32>,
    return
  }
  func.func @transform_0(%arg0: i32) -> (i32, i32, i32) {
    %c0_i32 = arith.constant 0 : i32
    %c0_i32_0 = arith.constant 0 : i32
    %c0_i32_1 = arith.constant 0 : i32
    return %arg0, %c0_i32, %c0_i32_0 : i32, i32, i32
  }
  func.func @transform_1(%arg0: i32) -> (i32, i32, i32) {
    %c0_i32 = arith.constant 0 : i32
    %c0_i32_0 = arith.constant 0 : i32
    %c0_i32_1 = arith.constant 0 : i32
    return %arg0, %c0_i32, %c0_i32_0 : i32, i32, i32
  }
  func.func @transform_2(%arg0: i32) -> (i32, i32) {
    %c0_i32 = arith.constant 0 : i32
    %c0_i32_0 = arith.constant 0 : i32
    %c0_i32_1 = arith.constant 0 : i32
    return %c0_i32, %c0_i32_0 : i32, i32
  }
  func.func @transform_3(%arg0: i32) -> (i32, i32) {
    %c0_i32 = arith.constant 0 : i32
    %c0_i32_0 = arith.constant 0 : i32
    %c0_i32_1 = arith.constant 0 : i32
    return %c0_i32, %c0_i32_0 : i32, i32
  }
  func.func @transform_4(%arg0: i32) -> (i32, i32) {
    %c0_i32 = arith.constant 0 : i32
    %c0_i32_0 = arith.constant 0 : i32
    %c0_i32_1 = arith.constant 0 : i32
    return %c0_i32, %c0_i32_0 : i32, i32
  }
  func.func @transform_5(%arg0: i32) -> (i32, i32) {
    %c0_i32 = arith.constant 0 : i32
    %c0_i32_0 = arith.constant 0 : i32
    %c0_i32_1 = arith.constant 0 : i32
    return %c0_i32, %c0_i32_0 : i32, i32
  }
  func.func @transform_6(%arg0: i32) -> (i32, i32, i32) {
    %c0_i32 = arith.constant 0 : i32
    %c0_i32_0 = arith.constant 0 : i32
    %c0_i32_1 = arith.constant 0 : i32
    return %arg0, %c0_i32, %c0_i32_0 : i32, i32, i32
  }
}

</mosaic_0001>

<llo_original>
// kernel: tpu_custom_call.1
$region0: #{tpu_custom_call.1}
  #allocation0 [shape = 'u32[]', space=smem, size = 0x4, offset = 0x4, fixed_abs, tag = 'smem constant byte address 0x4 - core index']
  #allocation1 [shape = 'u32[144,128]{1,0:T(1,128)}', space=vmem, size = 0x12000, scoped, tag = 'internal scratch']
  %s0 = inlined_call_operand.vmem [shape: f32[2,36,256], index: 0, kind: input, shape index: {}]
  %s1 = inlined_call_operand.vmem [shape: f32[2,4,256], index: 1, kind: input, shape index: {}]
  %s2 = inlined_call_operand.vmem [shape: f32[8,36], index: 2, kind: input, shape index: {}]
  %s3 = inlined_call_operand.vmem [shape: f32[8,1], index: 3, kind: input, shape index: {}]
  %s4 = inlined_call_operand.vmem [shape: f32[4,8], index: 4, kind: input, shape index: {}]
  %s5 = inlined_call_operand.vmem [shape: f32[4,1], index: 5, kind: input, shape index: {}]
  %s6 = inlined_call_operand.hbm [shape: f32[2,4,256], index: 6, kind: output, shape index: {}]
  %s7 = sld [smem:[#allocation0]]
  $region57: #{tpu_custom_call.1} parent=0
    _
  %s9 = ssub.s32 1, %s7
  %s10 = scalar_select 0, %s9, %s7
  $region1: #{tpu_custom_call.1} parent=0
    #allocation2 [shape = 'u8[8192]{0}', space=vmem, size = 0x2000, scoped, tag = 'output window, operand 0']
    #allocation3 [shape = 's32[2]{0}', space=sflag, size = 0x8, scoped, tag = 'scoped memory for tpu_custom_call.1']
    %11 = vsyncpa [#allocation3], 0
    %s12 = scalar_lea.sflag [#allocation3], 1
    %13 = vsyncpa %s12, 0
    loop: start=0, step=1, limit=4
    $region2: #{tpu_custom_call.1} parent=1 // loop_pre_header
      _
    $region3: #{tpu_custom_call.1} parent=1 // loop_header
      %s15 = sphi 0, %s19
      %p16 = scmp.ge.s32.totalorder %s15, 4
      %s25 = sphi 0, %s27
      %s28 = sphi 0, %s25
      %s29 = sphi 0, %s28
      %s45 = sphi 0, %s29
      %s51 = sphi 0, %s53
      %s54 = sphi 0, %s51
      %s55 = sphi 0, %s54
      %s71 = sphi 0, %s55
      %s75 = sphi 0, %s75
      %s77 = sphi 0, %s75
      %s78 = sphi 0, %s77
      %s92 = sphi 0, %s78
      %s96 = sphi 0, %s96
      %s98 = sphi 0, %s96
      %s99 = sphi 0, %s98
      %s113 = sphi 0, %s99
      %s117 = sphi 0, %s117
      %s119 = sphi 0, %s117
      %s120 = sphi 0, %s119
      %s134 = sphi 0, %s120
      %s138 = sphi 0, %s138
      %s140 = sphi 0, %s138
      %s141 = sphi 0, %s140
      %s155 = sphi 0, %s141
      %s161 = sphi 0, %s163
      %s164 = sphi 0, %s161
      %s165 = sphi 0, %s164
      %s181 = sphi 0, %s165
    $region4: #{tpu_custom_call.1} parent=1 // loop_header_branch
      %18 = sbr.rel (%p16) target = $region8
    $region5: #{tpu_custom_call.1} parent=1 // loop_body
      %s20 = ssub.s32 %s15, 1
      %s21 = ssub.s32 %s15, 2
      %s22 = sadd.s32 %s15, 1
      %s23 = ssub.s32 %s15, %s22
      %p24 = scmp.eq.s32.totalorder %s23, 0
      %s26 = sadd.s32 %s25, 1
      %s27 = scalar_select %p24, %s25, %s26
      %p30 = pneg %p24
      %p31 = scmp.eq.s32.totalorder %s15, 1
      %p32 = por %p30, %p31
      %p33 = scmp.ne.s32.totalorder %s25, %s28
      %p34 = scmp.eq.s32.totalorder %s15, 0
      %p35 = por %p33, %p34
      %p36 = scmp.ne.s32.totalorder %s25, %s28
      %p37 = scmp.eq.s32.totalorder %s20, 1
      %p38 = por %p36, %p37
      %p39 = scmp.ne.s32.totalorder %s28, %s29
      %p40 = scmp.eq.s32.totalorder %s20, 0
      %p41 = por %p39, %p40
      %p42 = scmp.ne.s32.totalorder %s28, %s29
      %p43 = scmp.eq.s32.totalorder %s21, 1
      %p44 = por %p42, %p43
      %p46 = scmp.ne.s32.totalorder %s29, %s45
      %p47 = scmp.eq.s32.totalorder %s21, 0
      %p48 = por %p46, %p47
      %s49 = ssub.s32 %s15, %s22
      %p50 = scmp.eq.s32.totalorder %s49, 0
      %s52 = sadd.s32 %s51, 1
      %s53 = scalar_select %p50, %s51, %s52
      %p56 = pneg %p50
      %p57 = scmp.eq.s32.totalorder %s15, 1
      %p58 = por %p56, %p57
      %p59 = scmp.ne.s32.totalorder %s51, %s54
      %p60 = scmp.eq.s32.totalorder %s15, 0
      %p61 = por %p59, %p60
      %p62 = scmp.ne.s32.totalorder %s51, %s54
      %p63 = scmp.eq.s32.totalorder %s20, 1
      %p64 = por %p62, %p63
      %p65 = scmp.ne.s32.totalorder %s54, %s55
      %p66 = scmp.eq.s32.totalorder %s20, 0
      %p67 = por %p65, %p66
      %p68 = scmp.ne.s32.totalorder %s54, %s55
      %p69 = scmp.eq.s32.totalorder %s21, 1
      %p70 = por %p68, %p69
      %p72 = scmp.ne.s32.totalorder %s55, %s71
      %p73 = scmp.eq.s32.totalorder %s21, 0
      %p74 = por %p72, %p73
      %s76 = sadd.s32 %s75, 1
      %p79 = scmp.eq.s32.totalorder %s15, 1
      %p80 = scmp.ne.s32.totalorder %s75, %s77
      %p81 = scmp.eq.s32.totalorder %s15, 0
      %p82 = por %p80, %p81
      %p83 = scmp.ne.s32.totalorder %s75, %s77
      %p84 = scmp.eq.s32.totalorder %s20, 1
      %p85 = por %p83, %p84
      %p86 = scmp.ne.s32.totalorder %s77, %s78
      %p87 = scmp.eq.s32.totalorder %s20, 0
      %p88 = por %p86, %p87
      %p89 = scmp.ne.s32.totalorder %s77, %s78
      %p90 = scmp.eq.s32.totalorder %s21, 1
      %p91 = por %p89, %p90
      %p93 = scmp.ne.s32.totalorder %s78, %s92
      %p94 = scmp.eq.s32.totalorder %s21, 0
      %p95 = por %p93, %p94
      %s97 = sadd.s32 %s96, 1
      %p100 = scmp.eq.s32.totalorder %s15, 1
      %p101 = scmp.ne.s32.totalorder %s96, %s98
      %p102 = scmp.eq.s32.totalorder %s15, 0
      %p103 = por %p101, %p102
      %p104 = scmp.ne.s32.totalorder %s96, %s98
      %p105 = scmp.eq.s32.totalorder %s20, 1
      %p106 = por %p104, %p105
      %p107 = scmp.ne.s32.totalorder %s98, %s99
      %p108 = scmp.eq.s32.totalorder %s20, 0
      %p109 = por %p107, %p108
      %p110 = scmp.ne.s32.totalorder %s98, %s99
      %p111 = scmp.eq.s32.totalorder %s21, 1
      %p112 = por %p110, %p111
      %p114 = scmp.ne.s32.totalorder %s99, %s113
      %p115 = scmp.eq.s32.totalorder %s21, 0
      %p116 = por %p114, %p115
      %s118 = sadd.s32 %s117, 1
      %p121 = scmp.eq.s32.totalorder %s15, 1
      %p122 = scmp.ne.s32.totalorder %s117, %s119
      %p123 = scmp.eq.s32.totalorder %s15, 0
      %p124 = por %p122, %p123
      %p125 = scmp.ne.s32.totalorder %s117, %s119
      %p126 = scmp.eq.s32.totalorder %s20, 1
      %p127 = por %p125, %p126
      %p128 = scmp.ne.s32.totalorder %s119, %s120
      %p129 = scmp.eq.s32.totalorder %s20, 0
      %p130 = por %p128, %p129
      %p131 = scmp.ne.s32.totalorder %s119, %s120
      %p132 = scmp.eq.s32.totalorder %s21, 1
      %p133 = por %p131, %p132
      %p135 = scmp.ne.s32.totalorder %s120, %s134
      %p136 = scmp.eq.s32.totalorder %s21, 0
      %p137 = por %p135, %p136
      %s139 = sadd.s32 %s138, 1
      %p142 = scmp.eq.s32.totalorder %s15, 1
      %p143 = scmp.ne.s32.totalorder %s138, %s140
      %p144 = scmp.eq.s32.totalorder %s15, 0
      %p145 = por %p143, %p144
      %p146 = scmp.ne.s32.totalorder %s138, %s140
      %p147 = scmp.eq.s32.totalorder %s20, 1
      %p148 = por %p146, %p147
      %p149 = scmp.ne.s32.totalorder %s140, %s141
      %p150 = scmp.eq.s32.totalorder %s20, 0
      %p151 = por %p149, %p150
      %p152 = scmp.ne.s32.totalorder %s140, %s141
      %p153 = scmp.eq.s32.totalorder %s21, 1
      %p154 = por %p152, %p153
      %p156 = scmp.ne.s32.totalorder %s141, %s155
      %p157 = scmp.eq.s32.totalorder %s21, 0
      %p158 = por %p156, %p157
      %s159 = ssub.s32 %s15, %s22
      %p160 = scmp.eq.s32.totalorder %s159, 0
      %s162 = sadd.s32 %s161, 1
      %s163 = scalar_select %p160, %s161, %s162
      %p166 = pneg %p160
      %p167 = scmp.eq.s32.totalorder %s15, 1
      %p168 = por %p166, %p167
      %p169 = scmp.ne.s32.totalorder %s161, %s164
      %p170 = scmp.eq.s32.totalorder %s15, 0
      %p171 = por %p169, %p170
      %p172 = scmp.ne.s32.totalorder %s161, %s164
      %p173 = scmp.eq.s32.totalorder %s20, 1
      %p174 = por %p172, %p173
      %p175 = scmp.ne.s32.totalorder %s164, %s165
      %p176 = scmp.eq.s32.totalorder %s20, 0
      %p177 = por %p175, %p176
      %p178 = scmp.ne.s32.totalorder %s164, %s165
      %p179 = scmp.eq.s32.totalorder %s21, 1
      %p180 = por %p178, %p179
      %p182 = scmp.ne.s32.totalorder %s165, %s181
      %p183 = scmp.eq.s32.totalorder %s21, 0
      %p184 = por %p182, %p183
      %p185 = scmp.le.s32.totalorder 1, %s15
      %p186 = scmp.lt.s32.totalorder %s15, 3
      %p187 = pnand %p185, %p186
      %p188 = pneg %p187
      // Predicated region
      $region9: #{tpu_custom_call.1} parent=5 // pred_check
        _
      $region10: #{tpu_custom_call.1} parent=5 // pred_check_branch
        %190 = sbr.rel (%p187) target = $region12
      $region11: #{tpu_custom_call.1} parent=5 // pred_region
        %s191 = ssub.s32 %s15, 1
        // Predicated region
        $region13: #{tpu_custom_call.1} parent=11 // pred_check
          %p192 = pneg %p88
        $region14: #{tpu_custom_call.1} parent=11 // pred_check_branch
          %194 = sbr.rel (%p192) target = $region16
        $region15: #{tpu_custom_call.1} parent=11 // pred_region
          _
        $region16: #{tpu_custom_call.1} parent=11 // pred_fallthru
          _
        // Predicated region
        $region17: #{tpu_custom_call.1} parent=11 // pred_check
          %p195 = pneg %p109
        $region18: #{tpu_custom_call.1} parent=11 // pred_check_branch
          %197 = sbr.rel (%p195) target = $region20
        $region19: #{tpu_custom_call.1} parent=11 // pred_region
          _
        $region20: #{tpu_custom_call.1} parent=11 // pred_fallthru
          _
        // Predicated region
        $region21: #{tpu_custom_call.1} parent=11 // pred_check
          %p198 = pneg %p130
        $region22: #{tpu_custom_call.1} parent=11 // pred_check_branch
          %200 = sbr.rel (%p198) target = $region24
        $region23: #{tpu_custom_call.1} parent=11 // pred_region
          _
        $region24: #{tpu_custom_call.1} parent=11 // pred_fallthru
          _
        // Predicated region
        $region25: #{tpu_custom_call.1} parent=11 // pred_check
          %p201 = pneg %p151
        $region26: #{tpu_custom_call.1} parent=11 // pred_check_branch
          %203 = sbr.rel (%p201) target = $region28
        $region27: #{tpu_custom_call.1} parent=11 // pred_region
          _
        $region28: #{tpu_custom_call.1} parent=11 // pred_fallthru
          _
      $region12: #{tpu_custom_call.1} parent=5 // pred_fallthru
        _
      %p204 = scmp.lt.s32.totalorder %s15, 2
      // Predicated region
      $region29: #{tpu_custom_call.1} parent=5 // pred_check
        %p205 = pneg %p204
      $region30: #{tpu_custom_call.1} parent=5 // pred_check_branch
        %207 = sbr.rel (%p205) target = $region32
      $region31: #{tpu_custom_call.1} parent=5 // pred_region
        // Predicated region
        $region33: #{tpu_custom_call.1} parent=31 // pred_check
          %p208 = pneg %p35
        $region34: #{tpu_custom_call.1} parent=31 // pred_check_branch
          %210 = sbr.rel (%p208) target = $region36
        $region35: #{tpu_custom_call.1} parent=31 // pred_region
          %p211 = scmp.lt.s32.totalorder %s15, 1
          %s212 = scalar_select %p211, %s15, 1
          %s213 = smul.addr %s212, 10
          %s214 = smul.addr %s213, 8
          %s215 = scalar_lea.vmem %s0, %s214
        $region36: #{tpu_custom_call.1} parent=31 // pred_fallthru
          _
        // Predicated region
        $region37: #{tpu_custom_call.1} parent=31 // pred_check
          %p216 = pneg %p61
        $region38: #{tpu_custom_call.1} parent=31 // pred_check_branch
          %218 = sbr.rel (%p216) target = $region40
        $region39: #{tpu_custom_call.1} parent=31 // pred_region
          %p219 = scmp.lt.s32.totalorder %s15, 1
          %s220 = scalar_select %p219, %s15, 1
          %s221 = smul.addr %s220, 2
          %s222 = smul.addr %s221, 4
          %s223 = scalar_lea.vmem %s1, %s222
        $region40: #{tpu_custom_call.1} parent=31 // pred_fallthru
          _
      $region32: #{tpu_custom_call.1} parent=5 // pred_fallthru
        _
      %p224 = scmp.le.s32.totalorder 1, %s15
      %p225 = scmp.lt.s32.totalorder %s15, 3
      %p226 = pnand %p224, %p225
      %p227 = pneg %p226
      // Predicated region
      $region41: #{tpu_custom_call.1} parent=5 // pred_check
        _
      $region42: #{tpu_custom_call.1} parent=5 // pred_check_branch
        %229 = sbr.rel (%p226) target = $region44
      $region43: #{tpu_custom_call.1} parent=5 // pred_region
        %s230 = ssub.s32 %s15, 1
        %p231 = scmp.lt.s32.totalorder %s20, 1
        %s232 = scalar_select %p231, %s20, 1
        %s233 = smul.addr %s232, 10
        %s234 = smul.addr %s233, 8
        %s235 = scalar_lea.vmem %s0, %s234
        %p236 = pneg %p41
        %p237 = pneg %p38
        %p238 = scmp.lt.s32.totalorder %s20, 1
        %s239 = scalar_select %p238, %s20, 1
        %s240 = smul.addr %s239, 2
        %s241 = smul.addr %s240, 4
        %s242 = scalar_lea.vmem %s1, %s241
        %p243 = pneg %p67
        %p244 = pneg %p64
        %p245 = pneg %p88
        %p246 = pneg %p85
        %p247 = pneg %p109
        %p248 = pneg %p106
        %p249 = pneg %p130
        %p250 = pneg %p127
        %p251 = pneg %p151
        %p252 = pneg %p148
        %p253 = pneg %p177
        %p254 = pneg %p174
        %s255 = sand.u32 %s164, 1
        %s256 = scalar_lea.sflag [#allocation3], %s255
        %s257 = sand.u32 %s164, 1
        %s258 = smul.addr %s257, 8
        %s259 = scalar_lea.vmem [#allocation2], %s258
        %p260 = scmp.lt.s32.totalorder %s20, 1
        %s261 = scalar_select %p260, %s20, 1
        %s262 = smul.addr %s261, 10
        %s263 = smul.addr %s262, 8
        %s264 = scalar_lea.vmem %s0, %s263
        %p265 = scmp.lt.s32.totalorder %s20, 1
        %s266 = scalar_select %p265, %s20, 1
        %s267 = smul.addr %s266, 2
        %s268 = smul.addr %s267, 4
        %s269 = scalar_lea.vmem %s1, %s268
        %v270 = vld [vmem:[%s264] sm:$0xff]
        %v271 = vld [vmem:[%s264 + $0x8] sm:$0xff]
        %v272 = vld [vmem:[%s264 + $0x10] sm:$0xff]
        %v273 = vld [vmem:[%s264 + $0x18] sm:$0xff]
        %v274 = vld [vmem:[%s264 + $0x20] sm:$0xff]
        %v275 = vld [vmem:[%s264 + $0x28] sm:$0xff]
        %v276 = vld [vmem:[%s264 + $0x30] sm:$0xff]
        %v277 = vld [vmem:[%s264 + $0x38] sm:$0xff]
        %v278 = vld [vmem:[%s264 + $0x40] sm:$0xf]
        %v279 = vld [vmem:[%s264 + $0x48] sm:$0xf]
        %v280 = vmax.f32 %v270, 0.0
        %v281 = vmax.f32 %v271, 0.0
        %v282 = vmax.f32 %v272, 0.0
        %v283 = vmax.f32 %v273, 0.0
        %v284 = vmax.f32 %v274, 0.0
        %v285 = vmax.f32 %v275, 0.0
        %v286 = vmax.f32 %v276, 0.0
        %v287 = vmax.f32 %v277, 0.0
        %v288 = vmax.f32 %v278, 0.0
        %v289 = vmax.f32 %v279, 0.0
        %v290 = vld [vmem:[%s2] sm:$0xff]
        %v291 = vld [vmem:[%s3] sm:$0xff]
        %293 = vset.pattern.permute.xlu0 0
        %294 = vperm.xlu0 %293, %v291
        %v295 = vpop.permute.xlu0 %294
        %vm297 = vcmask 293888
        %v299 = vsel %vm297, %v290, 0
        %vm301 = vcmask 1043456
        %v303 = vsel %vm301, %v288, 0
        %v306 = vsel %vm301, %v289, 0
        %308 = vmatprep.subr.mxu0 0.0
        %309 = vmatpush1.msra.mxu0 0.0
        %310 = vmatprep.subr.mxu0 0.0
        %311 = vmatpush1.msra.mxu0 0.0
        %312 = vmatprep.subr.mxu0 0.0
        %313 = vmatpush1.msra.mxu0 0.0
        %314 = vmatprep.subr.mxu0 0.0
        %315 = vmatpush1.msra.mxu0 0.0
        %316 = vmatprep.subr.mxu0 0.0
        %317 = vmatpush1.msra.mxu0 0.0
        %318 = vmatprep.subr.mxu0 0.0
        %319 = vmatpush1.msra.mxu0 0.0
        %320 = vmatprep.subr.mxu0 0.0
        %321 = vmatpush1.msra.mxu0 0.0
        %322 = vmatprep.subr.mxu0 0.0
        %323 = vmatpush1.msra.mxu0 0.0
        %324 = vmatprep.subr.mxu0 0.0
        %325 = vmatpush1.msra.mxu0 0.0
        %326 = vmatprep.subr.mxu0 0.0
        %327 = vmatpush1.msra.mxu0 0.0
        %328 = vmatprep.subr.mxu0 0.0
        %329 = vmatpush1.msra.mxu0 0.0
        %330 = vmatprep.subr.mxu0 %v306
        %331 = vmatpush1.msra.mxu0 %v303
        %332 = vmatprep.subr.mxu0 %v287
        %333 = vmatpush1.msra.mxu0 %v286
        %334 = vmatprep.subr.mxu0 %v285
        %335 = vmatpush1.msra.mxu0 %v284
        %336 = vmatprep.subr.mxu0 %v283
        %337 = vmatpush1.msra.mxu0 %v282
        %338 = vmatprep.subr.mxu0 %v281
        %339 = vmatpush1.msra.mxu0 %v280
        %340 = vmatprep.subr.mxu0 0.0
        %341 = vmatpush2.msra.mxu0 0.0
        %342 = vmatprep.subr.mxu0 0.0
        %343 = vmatpush2.msra.mxu0 0.0
        %344 = vmatprep.subr.mxu0 0.0
        %345 = vmatpush2.msra.mxu0 0.0
        %346 = vmatprep.subr.mxu0 0.0
        %347 = vmatpush2.msra.mxu0 0.0
        %348 = vmatprep.subr.mxu0 0.0
        %349 = vmatpush2.msra.mxu0 0.0
        %350 = vmatprep.subr.mxu0 0.0
        %351 = vmatpush2.msra.mxu0 0.0
        %352 = vmatprep.subr.mxu0 0.0
        %353 = vmatpush2.msra.mxu0 0.0
        %354 = vmatprep.subr.mxu0 0.0
        %355 = vmatpush2.msra.mxu0 0.0
        %356 = vmatprep.subr.mxu0 0.0
        %357 = vmatpush2.msra.mxu0 0.0
        %358 = vmatprep.subr.mxu0 0.0
        %359 = vmatpush2.msra.mxu0 0.0
        %360 = vmatprep.subr.mxu0 0.0
        %361 = vmatpush2.msra.mxu0 0.0
        %362 = vmatprep.subr.mxu0 0.0
        %363 = vmatpush2.msra.mxu0 0.0
        %364 = vmatprep.subr.mxu0 0.0
        %365 = vmatpush2.msra.mxu0 0.0
        %366 = vmatprep.subr.mxu0 0.0
        %367 = vmatpush2.msra.mxu0 0.0
        %368 = vmatprep.subr.mxu0 0.0
        %369 = vmatpush2.msra.mxu0 0.0
        %370 = vmatprep.subr.mxu0 0.0
        %371 = vmatpush2.msra.mxu0 0.0
        %372 = vmatprep.mubr.f32.mxu0 0.0
        %373 = vmatmul.mubr.f32.gmra.mxu0 %v299
        %v374 = vpop.f32.mrf.mxu0
        %v375 = vadd.f32 %v295, %v374
        %v376 = vpop.f32.mrf.mxu0
        %v377 = vadd.f32 %v295, %v376
        %378 = vdwg.mxu0
        %v379 = vmax.f32 %v375, 0.0
        %v380 = vmax.f32 %v377, 0.0
        %v381 = vld [vmem:[%s4] sm:$0xf]
        %v382 = vld [vmem:[%s5] sm:$0xf]
        %384 = vset.pattern.permute.xlu0 0
        %385 = vperm.xlu0 %384, %v382
        %v386 = vpop.permute.xlu0 %385
        %vm388 = vcmask 64512
        %v390 = vsel %vm388, %v381, 0
        %392 = vmatprep.subr.mxu0 0.0
        %393 = vmatpush1.msra.mxu0 0.0
        %394 = vmatprep.subr.mxu0 0.0
        %395 = vmatpush1.msra.mxu0 0.0
        %396 = vmatprep.subr.mxu0 0.0
        %397 = vmatpush1.msra.mxu0 0.0
        %398 = vmatprep.subr.mxu0 0.0
        %399 = vmatpush1.msra.mxu0 0.0
        %400 = vmatprep.subr.mxu0 0.0
        %401 = vmatpush1.msra.mxu0 0.0
        %402 = vmatprep.subr.mxu0 0.0
        %403 = vmatpush1.msra.mxu0 0.0
        %404 = vmatprep.subr.mxu0 0.0
        %405 = vmatpush1.msra.mxu0 0.0
        %406 = vmatprep.subr.mxu0 0.0
        %407 = vmatpush1.msra.mxu0 0.0
        %408 = vmatprep.subr.mxu0 0.0
        %409 = vmatpush1.msra.mxu0 0.0
        %410 = vmatprep.subr.mxu0 0.0
        %411 = vmatpush1.msra.mxu0 0.0
        %412 = vmatprep.subr.mxu0 0.0
        %413 = vmatpush1.msra.mxu0 0.0
        %414 = vmatprep.subr.mxu0 0.0
        %415 = vmatpush1.msra.mxu0 0.0
        %416 = vmatprep.subr.mxu0 0.0
        %417 = vmatpush1.msra.mxu0 0.0
        %418 = vmatprep.subr.mxu0 0.0
        %419 = vmatpush1.msra.mxu0 0.0
        %420 = vmatprep.subr.mxu0 0.0
        %421 = vmatpush1.msra.mxu0 0.0
        %422 = vmatprep.subr.mxu0 %v380
        %423 = vmatpush1.msra.mxu0 %v379
        %424 = vmatprep.subr.mxu0 0.0
        %425 = vmatpush2.msra.mxu0 0.0
        %426 = vmatprep.subr.mxu0 0.0
        %427 = vmatpush2.msra.mxu0 0.0
        %428 = vmatprep.subr.mxu0 0.0
        %429 = vmatpush2.msra.mxu0 0.0
        %430 = vmatprep.subr.mxu0 0.0
        %431 = vmatpush2.msra.mxu0 0.0
        %432 = vmatprep.subr.mxu0 0.0
        %433 = vmatpush2.msra.mxu0 0.0
        %434 = vmatprep.subr.mxu0 0.0
        %435 = vmatpush2.msra.mxu0 0.0
        %436 = vmatprep.subr.mxu0 0.0
        %437 = vmatpush2.msra.mxu0 0.0
        %438 = vmatprep.subr.mxu0 0.0
        %439 = vmatpush2.msra.mxu0 0.0
        %440 = vmatprep.subr.mxu0 0.0
        %441 = vmatpush2.msra.mxu0 0.0
        %442 = vmatprep.subr.mxu0 0.0
        %443 = vmatpush2.msra.mxu0 0.0
        %444 = vmatprep.subr.mxu0 0.0
        %445 = vmatpush2.msra.mxu0 0.0
        %446 = vmatprep.subr.mxu0 0.0
        %447 = vmatpush2.msra.mxu0 0.0
        %448 = vmatprep.subr.mxu0 0.0
        %449 = vmatpush2.msra.mxu0 0.0
        %450 = vmatprep.subr.mxu0 0.0
        %451 = vmatpush2.msra.mxu0 0.0
        %452 = vmatprep.subr.mxu0 0.0
        %453 = vmatpush2.msra.mxu0 0.0
        %454 = vmatprep.subr.mxu0 0.0
        %455 = vmatpush2.msra.mxu0 0.0
        %456 = vmatprep.mubr.f32.mxu0 0.0
        %457 = vmatmul.mubr.f32.gmra.mxu0 %v390
        %v458 = vpop.f32.mrf.mxu0
        %v459 = vadd.f32 %v386, %v458
        %v460 = vpop.f32.mrf.mxu0
        %v461 = vadd.f32 %v386, %v460
        %462 = vdwg.mxu0
        %v463 = vld [vmem:[%s269] sm:$0xff]
        %v465 = vcombine.high %v463, %v463
        %v467 = vadd.f32 %v459, %v463
        %v468 = vadd.f32 %v461, %v465
        %v471 = vcombine.low %v467, %v468
        %473 = vst [vmem:[%s259] sm:$0xff] %v471
        %s474 = sand.u32 %s164, 1
        %s475 = scalar_lea.sflag [#allocation3], %s474
        %s476 = sand.u32 %s164, 1
        %s477 = smul.addr %s476, 8
        %s478 = scalar_lea.vmem [#allocation2], %s477
        // Predicated region
        $region45: #{tpu_custom_call.1} parent=43 // pred_check
          %p479 = pneg %p174
        $region46: #{tpu_custom_call.1} parent=43 // pred_check_branch
          %481 = sbr.rel (%p479) target = $region48
        $region47: #{tpu_custom_call.1} parent=43 // pred_region
          %s483 = ssub.s32 128, 128
          %484 = vsyncadd %s475, %s483
          %s485 = smul.addr %s20, 2
          %s486 = smul.addr %s485, 64
          %s487 = scalar_lea.hbm %s6, %s486
          %s489 = sshll.u32 %s478, 4
          %s490 = int_to_ptr.vmem [resolvable:$true] %s489
          %492 = dma.vmem_to_hbm [thread:$0]  %s490, 128, %s487, %s475
        $region48: #{tpu_custom_call.1} parent=43 // pred_fallthru
          _
      $region44: #{tpu_custom_call.1} parent=5 // pred_fallthru
        _
      %p493 = scmp.le.s32.totalorder 2, %s15
      // Predicated region
      $region49: #{tpu_custom_call.1} parent=5 // pred_check
        %p494 = pneg %p493
      $region50: #{tpu_custom_call.1} parent=5 // pred_check_branch
        %496 = sbr.rel (%p494) target = $region52
      $region51: #{tpu_custom_call.1} parent=5 // pred_region
        %s497 = ssub.s32 %s15, 2
        // Predicated region
        $region53: #{tpu_custom_call.1} parent=51 // pred_check
          %p498 = pneg %p180
        $region54: #{tpu_custom_call.1} parent=51 // pred_check_branch
          %500 = sbr.rel (%p498) target = $region56
        $region55: #{tpu_custom_call.1} parent=51 // pred_region
          %s501 = sand.u32 %s165, 1
          %s502 = scalar_lea.sflag [#allocation3], %s501
          %s503 = sand.u32 %s165, 1
          %s504 = smul.addr %s503, 8
          %s505 = scalar_lea.vmem [#allocation2], %s504
          %506 = dma.done %s502, 128
        $region56: #{tpu_custom_call.1} parent=51 // pred_fallthru
          _
      $region52: #{tpu_custom_call.1} parent=5 // pred_fallthru
        _
    $region6: #{tpu_custom_call.1} parent=1 // loop_footer
      %s19 = sadd.s32 1, %s15
    $region7: #{tpu_custom_call.1} parent=1 // loop_footer_branch
      %14 = sbr.rel target = $region3
    $region8: #{tpu_custom_call.1} parent=1 // loop_exit
      _
    %507 = vsyncpa [#allocation3], 1
    %s508 = scalar_lea.sflag [#allocation3], 1
    %509 = vsyncpa %s508, 1

</llo_original>
